<compile_context>
chip_gen: v7x
topology: tpu7x:2x2x1
jax: 0.10.0
libtpu: 0.0.40
codegen_flags: <defaults>
</compile_context>

<pallas_src>
import functools

import jax
import jax.numpy as jnp
from jax.experimental import pallas as pl
from jax.experimental.pallas import tpu as pltpu

_LANE = 128


def _round_up(n, m):
    return ((n + m - 1) // m) * m


def _choose_tile_n(n, requested):
    """Atom-tile size: a multiple of 128 lanes (unless a single full tile),
    capped so the grid has >= 2 steps when possible (v7x two-TC 'parallel')."""
    half = _round_up(pl.cdiv(n, 2), _LANE)
    tile = min(max(int(requested), _LANE), half)
    tile = (tile // _LANE) * _LANE
    if tile >= n:
        return n, 1                      # single full tile (any N is legal)
    return tile, pl.cdiv(n, tile)


# ----------------------------------------------------------------------------
# Fused kernel: one NT matmul per atom tile.
#   yt  = W^T @ x^T   [R, tile_n]   per-atom packed head rows (transposed)
#   ps  = lane-sums   [R, 1]        per-tile atom-sums of every head row
# ----------------------------------------------------------------------------
def _fused_combine_kernel(x_ref, w_ref, yt_ref, ps_ref, *,
                          n_total, tile_n, need_mask):
    x = x_ref[...]                                        # [tile_n, F]
    if need_mask:
        # Ragged tail of the last tile: zero invalid rows so the lane-sums
        # (energies) are exact.  N is static; only program_id is dynamic.
        row = jax.lax.broadcasted_iota(jnp.int32, x.shape, 0)
        x = jnp.where(row + pl.program_id(0) * tile_n < n_total, x, 0.0)

    # yt[r, n] = sum_f W_t[r, f] * x[n, f]  -- single MXU matmul, f32 accum.
    yt = jax.lax.dot_general(
        w_ref[...], x,
        dimension_numbers=(((1,), (1,)), ((), ())),
        preferred_element_type=jnp.float32)               # [R, tile_n]

    yt_ref[...] = yt.astype(yt_ref.dtype)                 # lane-dense store
    ps_ref[...] = jnp.sum(yt, axis=1, keepdims=True)      # [R, 1] per tile


def fused_combine_apply(x, w_t, *, tile_n=2048):
    """Runs the single fused kernel.

    Args:
      x    [N, F]  node features (f32 or bf16 -- no wrapper cast is done).
      w_t  [R, F]  packed, weight-scaled head rows (pre-transposed).
    Returns:
      yt        [R, N]  per-atom packed head rows (f32)
      head_sums [R]     atom-sums of every packed head row (f32)
    """
    n, f = x.shape
    r = w_t.shape[0]
    tile, num_tiles = _choose_tile_n(n, tile_n)
    need_mask = (n % tile) != 0

    kernel = functools.partial(_fused_combine_kernel,
                               n_total=n, tile_n=tile, need_mask=need_mask)

    bytes_accessed = (n * f * x.dtype.itemsize          # x read
                      + r * f * w_t.dtype.itemsize      # resident weights
                      + r * n * 4                       # yt writeback
                      + num_tiles * r * 4)              # per-tile partials
    cost = pl.CostEstimate(flops=int(2 * n * f * r), transcendentals=0,
                           bytes_accessed=int(bytes_accessed))

    yt, ps = pl.pallas_call(
        kernel,
        grid=(num_tiles,),
        out_shape=(
            jax.ShapeDtypeStruct((r, n), jnp.float32),
            jax.ShapeDtypeStruct((num_tiles, r, 1), jnp.float32),
        ),
        in_specs=[
            pl.BlockSpec((tile, f), lambda i: (i, 0)),
            pl.BlockSpec((r, f), lambda i: (0, 0)),      # resident weights
        ],
        out_specs=(
            pl.BlockSpec((r, tile), lambda i: (0, i)),   # transposed, lane-dense
            pl.BlockSpec((None, r, 1), lambda i: (i, 0, 0)),
        ),
        compiler_params=pltpu.CompilerParams(
            dimension_semantics=("parallel",),           # megacore split on v7x
        ),
        cost_estimate=cost,
    )(x, w_t)

    head_sums = jnp.sum(ps, axis=0)[:, 0]                # tiny [num_tiles,R,1]
    return yt, head_sums


# ----------------------------------------------------------------------------
# Synthetic sub-potential (stands in for a CACE potential nn.Module):
#   energy head w_e: [F, 1] -> energy = sum_atoms(x @ w_e)   [1, 1]
#   forces head w_f: [F, 3] -> forces = x @ w_f              [N, 3]
# ----------------------------------------------------------------------------
class SyntheticPotential:
    required_derivatives = ["positions"]

    def __init__(self, suffix, w_e, w_f):
        self.suffix = suffix
        self.w_e = w_e
        self.w_f = w_f
        self.energy_key = f"CACE_energy_{suffix}"
        self.forces_key = f"CACE_forces_{suffix}"


# ----------------------------------------------------------------------------
# CombinePotential (JAX/Pallas port of the PyTorch module)
# ----------------------------------------------------------------------------
class CombinePotential:
    """Fused port of cace.models.combined.CombinePotential.

    All sub-potential heads and the weighted default_operation are folded at
    construction time into one packed (pre-transposed) weight matrix, so the
    forward pass is a single Pallas kernel launch.
    """

    def __init__(self, potentials, potential_keys, operation=None,
                 tile_n=2048, param_dtype=jnp.float32):
        self.models = list(potentials)
        self.potential_keys = potential_keys
        self.operation = operation
        self.tile_n = tile_n

        self.required_derivatives = []
        for potential in potentials:
            for d in potential.required_derivatives:
                if d not in self.required_derivatives:
                    self.required_derivatives.append(d)

        self.out_keys = []
        for key in potential_keys[0]:
            if all(key in pk for pk in self.potential_keys) and key != "weight":
                self.out_keys.append(key)

        # ------- pack heads + output-row metadata (trace time) --------------
        blocks = []          # [F, k] column blocks, already weight-scaled
        col_specs = []       # (output_key, kind, row_start, nrows)

        def _add(key, kind, mat):
            off = sum(b.shape[1] for b in blocks)
            blocks.append(jnp.asarray(mat, jnp.float32))
            col_specs.append((key, kind, off, mat.shape[1]))

        # (1) per-potential outputs, weight-scaled once here -- reproduces the
        #     PyTorch in-place `v_now *= weight` aliasing of the raw entries.
        for pot, pk in zip(self.models, self.potential_keys):
            w = float(pk.get("weight", 1.0))
            _add(pot.forces_key, "forces", w * pot.w_f)
            _add(pot.energy_key, "energy", w * pot.w_e)

        # (2) combined outputs: default_operation == stack().sum(0) folds into
        #     a pre-summed head column block (default operation only).
        if operation is None:
            for key in self.out_keys:
                combined, kind = None, None
                for pot, pk in zip(self.models, self.potential_keys):
                    w = float(pk.get("weight", 1.0))
                    inner = pk[key]
                    if inner == pot.forces_key:
                        head, kind = pot.w_f, "forces"
                    elif inner == pot.energy_key:
                        head, kind = pot.w_e, "energy"
                    else:
                        raise KeyError(f"unknown inner key {inner!r}")
                    combined = w * head if combined is None else combined + w * head
                _add(key, kind, combined)

        w_packed = jnp.concatenate(blocks, axis=1)        # [F, n_cols]
        n_cols = w_packed.shape[1]
        r = _round_up(max(n_cols, 8), 8)                  # sublane-packed rows
        if r != n_cols:
            w_packed = jnp.pad(w_packed, ((0, 0), (0, r - n_cols)))
        # Pre-transposed [R, F]; cast once at construction (pass bf16
        # node_feats from upstream if you want bf16 MXU operands).
        self._w_t = jnp.transpose(w_packed).astype(param_dtype)
        self._col_specs = col_specs

    def __call__(self, data, training=False, compute_stress=False,
                 compute_virials=False, output_index=None):
        x = data["node_feats"]                            # [N, F], no cast here
        yt, head_sums = fused_combine_apply(x, self._w_t, tile_n=self.tile_n)

        output = {}
        for key, kind, off, nrows in self._col_specs:
            if kind == "forces":
                # cheap row slice + one small [nrows, N] -> [N, nrows] transpose
                output[key] = jnp.transpose(yt[off:off + nrows, :])
            else:   # scalar energy = atom-sum of its packed head row
                output[key] = head_sums[off:off + nrows].reshape(1, nrows)

        if self.operation is not None:
            # TODO(synk): user-supplied `operation` callables cannot be folded
            # into the kernel; apply them in JAX on the (already weight-scaled)
            # per-potential values, mirroring PyTorch's operation(list) call.
            for key in self.out_keys:
                output[key] = self.operation(
                    [output[pk[key]] for pk in self.potential_keys])
        return output


# ----------------------------------------------------------------------------
if __name__ == "__main__":
    key = jax.random.PRNGKey(0)
    k_x, k_e1, k_f1, k_e2, k_f2 = jax.random.split(key, 5)

    N_ATOMS, F = 200, 32
    x = jax.random.normal(k_x, (N_ATOMS, F), jnp.float32)

    # Deterministic synthetic "checkpoints" for the two sub-potentials.
    w_e1 = 0.1 * jax.random.normal(k_e1, (F, 1), jnp.float32)
    w_f1 = 0.1 * jax.random.normal(k_f1, (F, 3), jnp.float32)
    w_e2 = 0.1 * jax.random.normal(k_e2, (F, 1), jnp.float32)
    w_f2 = 0.1 * jax.random.normal(k_f2, (F, 3), jnp.float32)

    pot_intra = SyntheticPotential("intra", w_e1, w_f1)
    pot_inter = SyntheticPotential("inter", w_e2, w_f2)

    potential_keys = [
        {"CACE_energy": "CACE_energy_intra",
         "CACE_forces": "CACE_forces_intra",
         "weight": 1.0},
        {"CACE_energy": "CACE_energy_inter",
         "CACE_forces": "CACE_forces_inter",
         "weight": 0.01},
    ]

    model = CombinePotential([pot_intra, pot_inter], potential_keys)

    def check(x_in):
        n = x_in.shape[0]
        out = model({"node_feats": x_in})
        jax.block_until_ready(out)

        e1 = jnp.sum(x_in @ w_e1)
        e2 = jnp.sum(x_in @ w_e2)
        f1 = x_in @ w_f1
        f2 = x_in @ w_f2
        ref_e = 1.0 * e1 + 0.01 * e2
        ref_f = 1.0 * f1 + 0.01 * f2

        assert out["CACE_energy"].shape == (1, 1)
        assert out["CACE_forces"].shape == (n, 3)
        assert jnp.allclose(out["CACE_energy"][0, 0], ref_e,
                            atol=1e-3, rtol=1e-3)
        assert jnp.allclose(out["CACE_forces"], ref_f, atol=1e-4, rtol=1e-3)
        # PyTorch in-place `v *= weight` aliasing: per-potential entries scaled.
        assert jnp.allclose(out["CACE_energy_inter"][0, 0], 0.01 * e2,
                            atol=1e-3, rtol=1e-3)
        assert jnp.allclose(out["CACE_forces_intra"], 1.0 * f1,
                            atol=1e-4, rtol=1e-3)

    # Multi-tile path with a ragged last tile (N=200 -> two 128-row tiles,
    # in-kernel tail mask), and single-full-tile path (N=64).
    check(x)
    check(x[:64])

    print("KERNEL_OK")
</pallas_src>

<mosaic_0001>
module attributes {stable_mosaic.version = 11 : i64} {
  func.func @_fused_combine_kernel(%arg0: i32, %arg1: memref<128x32xf32, #tpu.memory_space<vmem>>, %arg2: memref<16x32xf32, #tpu.memory_space<vmem>>, %arg3: memref<16x128xf32, #tpu.memory_space<vmem>>, %arg4: memref<1x16x1xf32, #tpu.memory_space<vmem>>) attributes {dimension_semantics = [#tpu.dimension_semantics<parallel>], iteration_bounds = array<i64: 2>, scalar_prefetch = 0 : i64, scratch_operands = 0 : i64, tpu.core_type = #tpu.core_type<tc>, window_params = [{transform_indices = @transform_0, window_bounds = array<i64: 128, 32>}, {pipeline_mode = #tpu.pipeline_mode<synchronous>, transform_indices = @transform_1, window_bounds = array<i64: 16, 32>}, {transform_indices = @transform_2, window_bounds = array<i64: 16, 128>}, {transform_indices = @transform_3, window_bounds = array<i64: 1, 16, 1>}]} {
    %c0 = arith.constant 0 : index
    %c0_0 = arith.constant 0 : index
    %0 = vector.load %arg1[%c0, %c0_0] : memref<128x32xf32, #tpu.memory_space<vmem>>, vector<128x32xf32>
    %1 = tpu.iota {dimensions = array<i32: 0>} : vector<128x32xi32>
    %c128_i32 = arith.constant 128 : i32
    %2 = arith.muli %arg0, %c128_i32 : i32
    %3 = vector.broadcast %2 : i32 to vector<128x32xi32>
    %4 = arith.addi %1, %3 : vector<128x32xi32>
    %c200_i32 = arith.constant 200 : i32
    %5 = vector.broadcast %c200_i32 : i32 to vector<128x32xi32>
    %6 = arith.cmpi slt, %4, %5 : vector<128x32xi32>
    %cst = arith.constant 0.000000e+00 : f32
    %7 = vector.broadcast %cst : f32 to vector<128x32xf32>
    %8 = arith.select %6, %0, %7 : vector<128x32xi1>, vector<128x32xf32>
    %c0_1 = arith.constant 0 : index
    %c0_2 = arith.constant 0 : index
    %9 = vector.load %arg2[%c0_1, %c0_2] : memref<16x32xf32, #tpu.memory_space<vmem>>, vector<16x32xf32>
    %cst_3 = arith.constant dense<0.000000e+00> : vector<16x128xf32>
    %10 = tpu.matmul %9, %8, %cst_3 {dimension_numbers = #tpu.dot_dimension_numbers<[1], [1], [0], [0], [0, 0, 1, 0], [], []>} : vector<16x32xf32>, vector<128x32xf32>, vector<16x128xf32> -> vector<16x128xf32>
    %c0_4 = arith.constant 0 : index
    %c0_5 = arith.constant 0 : index
    %11 = vector.load %arg3[%c0_4, %c0_5] : memref<16x128xf32, #tpu.memory_space<vmem>>, vector<16x128xf32>
    tpu.vector_store %arg3[%c0_4, %c0_5], %10 {strides = array<i32>} : memref<16x128xf32, #tpu.memory_space<vmem>>, vector<16x128xf32>,
    %cst_6 = arith.constant dense<0.000000e+00> : vector<16xf32>
    %12 = vector.multi_reduction <add>, %10, %cst_6 [1] : vector<16x128xf32> to vector<16xf32>
    %13 = vector.shape_cast %12 : vector<16xf32> to vector<16x1xf32>
    %c0_7 = arith.constant 0 : index
    %c0_8 = arith.constant 0 : index
    %c0_9 = arith.constant 0 : index
    %14 = vector.load %arg4[%c0_7, %c0_8, %c0_9] : memref<1x16x1xf32, #tpu.memory_space<vmem>>, vector<1x16x1xf32>
    %15 = vector.shape_cast %14 : vector<1x16x1xf32> to vector<16x1xf32>
    %16 = vector.shape_cast %13 : vector<16x1xf32> to vector<1x16x1xf32>
    tpu.vector_store %arg4[%c0_7, %c0_8, %c0_9], %16 {strides = array<i32>} : memref<1x16x1xf32, #tpu.memory_space<vmem>>, vector<1x16x1xf32>,
    return
  }
  func.func @transform_0(%arg0: i32) -> (i32, i32) {
    %c0_i32 = arith.constant 0 : i32
    %c0_i32_0 = arith.constant 0 : i32
    return %arg0, %c0_i32 : i32, i32
  }
  func.func @transform_1(%arg0: i32) -> (i32, i32) {
    %c0_i32 = arith.constant 0 : i32
    %c0_i32_0 = arith.constant 0 : i32
    %c0_i32_1 = arith.constant 0 : i32
    return %c0_i32, %c0_i32_0 : i32, i32
  }
  func.func @transform_2(%arg0: i32) -> (i32, i32) {
    %c0_i32 = arith.constant 0 : i32
    %c0_i32_0 = arith.constant 0 : i32
    return %c0_i32, %arg0 : i32, i32
  }
  func.func @transform_3(%arg0: i32) -> (i32, i32, i32) {
    %c0_i32 = arith.constant 0 : i32
    %c0_i32_0 = arith.constant 0 : i32
    %c0_i32_1 = arith.constant 0 : i32
    return %arg0, %c0_i32, %c0_i32_0 : i32, i32, i32
  }
}

</mosaic_0001>

<llo_original>
// kernel: tpu_custom_call.1
$region0: #{tpu_custom_call.1}
  #allocation0 [shape = 'u32[]', space=smem, size = 0x4, offset = 0x4, fixed_abs, tag = 'smem constant byte address 0x4 - core index']
  #allocation1 [shape = 'u32[144,128]{1,0:T(1,128)}', space=vmem, size = 0x12000, scoped, tag = 'internal scratch']
  %s0 = inlined_call_operand.vmem [shape: f32[200,32], index: 0, kind: input, shape index: {}]
  %s1 = inlined_call_operand.vmem [shape: f32[16,32], index: 1, kind: input, shape index: {}]
  %s2 = inlined_call_operand.hbm [shape: f32[16,200], index: 2, kind: output, shape index: {0}]
  %s3 = inlined_call_operand.vmem [shape: f32[2,16,1], index: 3, kind: output, shape index: {1}]
  %4 = xla_tuple %s2, %s3
  %s5 = sld [smem:[#allocation0]]
  $region49: #{tpu_custom_call.1} parent=0
    _
  %s7 = ssub.s32 1, %s5
  %s8 = scalar_select 0, %s7, %s5
  $region1: #{tpu_custom_call.1} parent=0
    #allocation2 [shape = 'u8[16384]{0}', space=vmem, size = 0x4000, scoped, tag = 'output window, operand 0']
    #allocation3 [shape = 's32[2]{0}', space=sflag, size = 0x8, scoped, tag = 'scoped memory for tpu_custom_call.1']
    %9 = vsyncpa [#allocation3], 0
    %s10 = scalar_lea.sflag [#allocation3], 1
    %11 = vsyncpa %s10, 0
    loop: start=0, step=1, limit=4
    $region2: #{tpu_custom_call.1} parent=1 // loop_pre_header
      _
    $region3: #{tpu_custom_call.1} parent=1 // loop_header
      %s13 = sphi 0, %s17
      %p14 = scmp.ge.s32.totalorder %s13, 4
      %s23 = sphi 0, %s25
      %s26 = sphi 0, %s23
      %s27 = sphi 0, %s26
      %s43 = sphi 0, %s27
      %s47 = sphi 0, %s47
      %s49 = sphi 0, %s47
      %s50 = sphi 0, %s49
      %s64 = sphi 0, %s50
      %s70 = sphi 0, %s72
      %s73 = sphi 0, %s70
      %s74 = sphi 0, %s73
      %s90 = sphi 0, %s74
      %s96 = sphi 0, %s98
      %s99 = sphi 0, %s96
      %s100 = sphi 0, %s99
      %s116 = sphi 0, %s100
    $region4: #{tpu_custom_call.1} parent=1 // loop_header_branch
      %16 = sbr.rel (%p14) target = $region8
    $region5: #{tpu_custom_call.1} parent=1 // loop_body
      %s18 = ssub.s32 %s13, 1
      %s19 = ssub.s32 %s13, 2
      %s20 = sadd.s32 %s13, 1
      %s21 = ssub.s32 %s13, %s20
      %p22 = scmp.eq.s32.totalorder %s21, 0
      %s24 = sadd.s32 %s23, 1
      %s25 = scalar_select %p22, %s23, %s24
      %p28 = pneg %p22
      %p29 = scmp.eq.s32.totalorder %s13, 1
      %p30 = por %p28, %p29
      %p31 = scmp.ne.s32.totalorder %s23, %s26
      %p32 = scmp.eq.s32.totalorder %s13, 0
      %p33 = por %p31, %p32
      %p34 = scmp.ne.s32.totalorder %s23, %s26
      %p35 = scmp.eq.s32.totalorder %s18, 1
      %p36 = por %p34, %p35
      %p37 = scmp.ne.s32.totalorder %s26, %s27
      %p38 = scmp.eq.s32.totalorder %s18, 0
      %p39 = por %p37, %p38
      %p40 = scmp.ne.s32.totalorder %s26, %s27
      %p41 = scmp.eq.s32.totalorder %s19, 1
      %p42 = por %p40, %p41
      %p44 = scmp.ne.s32.totalorder %s27, %s43
      %p45 = scmp.eq.s32.totalorder %s19, 0
      %p46 = por %p44, %p45
      %s48 = sadd.s32 %s47, 1
      %p51 = scmp.eq.s32.totalorder %s13, 1
      %p52 = scmp.ne.s32.totalorder %s47, %s49
      %p53 = scmp.eq.s32.totalorder %s13, 0
      %p54 = por %p52, %p53
      %p55 = scmp.ne.s32.totalorder %s47, %s49
      %p56 = scmp.eq.s32.totalorder %s18, 1
      %p57 = por %p55, %p56
      %p58 = scmp.ne.s32.totalorder %s49, %s50
      %p59 = scmp.eq.s32.totalorder %s18, 0
      %p60 = por %p58, %p59
      %p61 = scmp.ne.s32.totalorder %s49, %s50
      %p62 = scmp.eq.s32.totalorder %s19, 1
      %p63 = por %p61, %p62
      %p65 = scmp.ne.s32.totalorder %s50, %s64
      %p66 = scmp.eq.s32.totalorder %s19, 0
      %p67 = por %p65, %p66
      %s68 = ssub.s32 %s13, %s20
      %p69 = scmp.eq.s32.totalorder %s68, 0
      %s71 = sadd.s32 %s70, 1
      %s72 = scalar_select %p69, %s70, %s71
      %p75 = pneg %p69
      %p76 = scmp.eq.s32.totalorder %s13, 1
      %p77 = por %p75, %p76
      %p78 = scmp.ne.s32.totalorder %s70, %s73
      %p79 = scmp.eq.s32.totalorder %s13, 0
      %p80 = por %p78, %p79
      %p81 = scmp.ne.s32.totalorder %s70, %s73
      %p82 = scmp.eq.s32.totalorder %s18, 1
      %p83 = por %p81, %p82
      %p84 = scmp.ne.s32.totalorder %s73, %s74
      %p85 = scmp.eq.s32.totalorder %s18, 0
      %p86 = por %p84, %p85
      %p87 = scmp.ne.s32.totalorder %s73, %s74
      %p88 = scmp.eq.s32.totalorder %s19, 1
      %p89 = por %p87, %p88
      %p91 = scmp.ne.s32.totalorder %s74, %s90
      %p92 = scmp.eq.s32.totalorder %s19, 0
      %p93 = por %p91, %p92
      %s94 = ssub.s32 %s13, %s20
      %p95 = scmp.eq.s32.totalorder %s94, 0
      %s97 = sadd.s32 %s96, 1
      %s98 = scalar_select %p95, %s96, %s97
      %p101 = pneg %p95
      %p102 = scmp.eq.s32.totalorder %s13, 1
      %p103 = por %p101, %p102
      %p104 = scmp.ne.s32.totalorder %s96, %s99
      %p105 = scmp.eq.s32.totalorder %s13, 0
      %p106 = por %p104, %p105
      %p107 = scmp.ne.s32.totalorder %s96, %s99
      %p108 = scmp.eq.s32.totalorder %s18, 1
      %p109 = por %p107, %p108
      %p110 = scmp.ne.s32.totalorder %s99, %s100
      %p111 = scmp.eq.s32.totalorder %s18, 0
      %p112 = por %p110, %p111
      %p113 = scmp.ne.s32.totalorder %s99, %s100
      %p114 = scmp.eq.s32.totalorder %s19, 1
      %p115 = por %p113, %p114
      %p117 = scmp.ne.s32.totalorder %s100, %s116
      %p118 = scmp.eq.s32.totalorder %s19, 0
      %p119 = por %p117, %p118
      %p120 = scmp.le.s32.totalorder 1, %s13
      %p121 = scmp.lt.s32.totalorder %s13, 3
      %p122 = pnand %p120, %p121
      %p123 = pneg %p122
      // Predicated region
      $region9: #{tpu_custom_call.1} parent=5 // pred_check
        _
      $region10: #{tpu_custom_call.1} parent=5 // pred_check_branch
        %125 = sbr.rel (%p122) target = $region12
      $region11: #{tpu_custom_call.1} parent=5 // pred_region
        %s126 = ssub.s32 %s13, 1
        // Predicated region
        $region13: #{tpu_custom_call.1} parent=11 // pred_check
          %p127 = pneg %p60
        $region14: #{tpu_custom_call.1} parent=11 // pred_check_branch
          %129 = sbr.rel (%p127) target = $region16
        $region15: #{tpu_custom_call.1} parent=11 // pred_region
          _
        $region16: #{tpu_custom_call.1} parent=11 // pred_fallthru
          _
      $region12: #{tpu_custom_call.1} parent=5 // pred_fallthru
        _
      %p130 = scmp.lt.s32.totalorder %s13, 2
      // Predicated region
      $region17: #{tpu_custom_call.1} parent=5 // pred_check
        %p131 = pneg %p130
      $region18: #{tpu_custom_call.1} parent=5 // pred_check_branch
        %133 = sbr.rel (%p131) target = $region20
      $region19: #{tpu_custom_call.1} parent=5 // pred_region
        // Predicated region
        $region21: #{tpu_custom_call.1} parent=19 // pred_check
          %p134 = pneg %p33
        $region22: #{tpu_custom_call.1} parent=19 // pred_check_branch
          %136 = sbr.rel (%p134) target = $region24
        $region23: #{tpu_custom_call.1} parent=19 // pred_region
          %s137 = smul.u32 16, %s13
          %s138 = ssub.s32 25, %s137
          %p139 = scmp.lt.s32.totalorder %s138, 16
          %s140 = scalar_select %p139, %s138, 16
          %s141 = smul.u32 128, %s140
          %p142 = scmp.lt.s32.totalorder %s137, 24
          %s143 = scalar_select %p142, %s137, 24
          %s144 = smul.addr %s143, 8
          %s145 = scalar_lea.vmem %s0, %s144
          %s146 = smul.u32 16, %s13
          %s147 = ssub.s32 25, %s146
          %p148 = scmp.lt.s32.totalorder %s147, 16
          %s149 = scalar_select %p148, %s147, 16
          %s150 = smul.u32 128, %s149
        $region24: #{tpu_custom_call.1} parent=19 // pred_fallthru
          _
      $region20: #{tpu_custom_call.1} parent=5 // pred_fallthru
        _
      %p151 = scmp.le.s32.totalorder 1, %s13
      %p152 = scmp.lt.s32.totalorder %s13, 3
      %p153 = pnand %p151, %p152
      %p154 = pneg %p153
      // Predicated region
      $region25: #{tpu_custom_call.1} parent=5 // pred_check
        _
      $region26: #{tpu_custom_call.1} parent=5 // pred_check_branch
        %156 = sbr.rel (%p153) target = $region28
      $region27: #{tpu_custom_call.1} parent=5 // pred_region
        %s157 = ssub.s32 %s13, 1
        %s158 = smul.u32 16, %s18
        %s159 = ssub.s32 25, %s158
        %p160 = scmp.lt.s32.totalorder %s159, 16
        %s161 = scalar_select %p160, %s159, 16
        %s162 = smul.u32 128, %s161
        %p163 = scmp.lt.s32.totalorder %s158, 24
        %s164 = scalar_select %p163, %s158, 24
        %s165 = smul.addr %s164, 8
        %s166 = scalar_lea.vmem %s0, %s165
        %p167 = pneg %p39
        %p168 = pneg %p36
        %p169 = pneg %p60
        %p170 = pneg %p57
        %p171 = pneg %p86
        %p172 = pneg %p83
        %s173 = sand.u32 %s73, 1
        %s174 = scalar_lea.sflag [#allocation3], %s173
        %s175 = sand.u32 %s73, 1
        %s176 = smul.addr %s175, 16
        %s177 = scalar_lea.vmem [#allocation2], %s176
        %p178 = pneg %p112
        %p179 = pneg %p109
        %p180 = scmp.lt.s32.totalorder %s18, 1
        %s181 = scalar_select %p180, %s18, 1
        %s182 = smul.addr %s181, 2
        %s183 = smul.addr %s182, 8
        %s184 = scalar_lea.vmem %s3, %s183
        %s185 = smul.u32 16, %s18
        %s186 = ssub.s32 25, %s185
        %p187 = scmp.lt.s32.totalorder %s186, 16
        %s188 = scalar_select %p187, %s186, 16
        %s189 = smul.u32 128, %s188
        %p190 = scmp.lt.s32.totalorder %s185, 24
        %s191 = scalar_select %p190, %s185, 24
        %s192 = smul.addr %s191, 8
        %s193 = scalar_lea.vmem %s0, %s192
        %s194 = smul.u32 16, %s18
        %s195 = ssub.s32 25, %s194
        %p196 = scmp.lt.s32.totalorder %s195, 16
        %s197 = scalar_select %p196, %s195, 16
        %s198 = smul.u32 128, %s197
        %p199 = scmp.lt.s32.totalorder %s18, 1
        %s200 = scalar_select %p199, %s18, 1
        %s201 = smul.addr %s200, 2
        %s202 = smul.addr %s201, 8
        %s203 = scalar_lea.vmem %s3, %s202
        %v204 = vld [vmem:[%s193] sm:$0xff]
        %v205 = vld [vmem:[%s193 + $0x8] sm:$0xff]
        %v206 = vld [vmem:[%s193 + $0x10] sm:$0xff]
        %v207 = vld [vmem:[%s193 + $0x18] sm:$0xff]
        %v208 = vld [vmem:[%s193 + $0x20] sm:$0xff]
        %v209 = vld [vmem:[%s193 + $0x28] sm:$0xff]
        %v210 = vld [vmem:[%s193 + $0x30] sm:$0xff]
        %v211 = vld [vmem:[%s193 + $0x38] sm:$0xff]
        %v212 = vld [vmem:[%s193 + $0x40] sm:$0xff]
        %v213 = vld [vmem:[%s193 + $0x48] sm:$0xff]
        %v214 = vld [vmem:[%s193 + $0x50] sm:$0xff]
        %v215 = vld [vmem:[%s193 + $0x58] sm:$0xff]
        %v216 = vld [vmem:[%s193 + $0x60] sm:$0xff]
        %v217 = vld [vmem:[%s193 + $0x68] sm:$0xff]
        %v218 = vld [vmem:[%s193 + $0x70] sm:$0xff]
        %v219 = vld [vmem:[%s193 + $0x78] sm:$0xff]
        %v220 = vlaneseq
        %v221 = vshrl.u32 %v220, 7
        %v222 = vadd.s32 %v221, 8
        %v223 = vadd.s32 %v221, 16
        %v224 = vadd.s32 %v221, 24
        %v225 = vadd.s32 %v221, 32
        %v226 = vadd.s32 %v221, 40
        %v227 = vadd.s32 %v221, 48
        %v228 = vadd.s32 %v221, 56
        %v229 = vadd.s32 %v221, 64
        %v230 = vadd.s32 %v221, 72
        %v231 = vadd.s32 %v221, 80
        %v232 = vadd.s32 %v221, 88
        %v233 = vadd.s32 %v221, 96
        %v234 = vadd.s32 %v221, 104
        %v235 = vadd.s32 %v221, 112
        %v236 = vadd.s32 %v221, 120
        %s237 = smul.u32 %s18, 128
        %v238 = vstv %s237
        %v239 = vadd.s32 %v221, %v238
        %v240 = vadd.s32 %v222, %v238
        %v241 = vadd.s32 %v223, %v238
        %v242 = vadd.s32 %v224, %v238
        %v243 = vadd.s32 %v225, %v238
        %v244 = vadd.s32 %v226, %v238
        %v245 = vadd.s32 %v227, %v238
        %v246 = vadd.s32 %v228, %v238
        %v247 = vadd.s32 %v229, %v238
        %v248 = vadd.s32 %v230, %v238
        %v249 = vadd.s32 %v231, %v238
        %v250 = vadd.s32 %v232, %v238
        %v251 = vadd.s32 %v233, %v238
        %v252 = vadd.s32 %v234, %v238
        %v253 = vadd.s32 %v235, %v238
        %v254 = vadd.s32 %v236, %v238
        %vm255 = vcmp.lt.s32.totalorder %v239, 200
        %vm256 = vcmp.lt.s32.totalorder %v240, 200
        %vm257 = vcmp.lt.s32.totalorder %v241, 200
        %vm258 = vcmp.lt.s32.totalorder %v242, 200
        %vm259 = vcmp.lt.s32.totalorder %v243, 200
        %vm260 = vcmp.lt.s32.totalorder %v244, 200
        %vm261 = vcmp.lt.s32.totalorder %v245, 200
        %vm262 = vcmp.lt.s32.totalorder %v246, 200
        %vm263 = vcmp.lt.s32.totalorder %v247, 200
        %vm264 = vcmp.lt.s32.totalorder %v248, 200
        %vm265 = vcmp.lt.s32.totalorder %v249, 200
        %vm266 = vcmp.lt.s32.totalorder %v250, 200
        %vm267 = vcmp.lt.s32.totalorder %v251, 200
        %vm268 = vcmp.lt.s32.totalorder %v252, 200
        %vm269 = vcmp.lt.s32.totalorder %v253, 200
        %vm270 = vcmp.lt.s32.totalorder %v254, 200
        %v271 = vsel %vm255, %v204, 0.0
        %v272 = vsel %vm256, %v205, 0.0
        %v273 = vsel %vm257, %v206, 0.0
        %v274 = vsel %vm258, %v207, 0.0
        %v275 = vsel %vm259, %v208, 0.0
        %v276 = vsel %vm260, %v209, 0.0
        %v277 = vsel %vm261, %v210, 0.0
        %v278 = vsel %vm262, %v211, 0.0
        %v279 = vsel %vm263, %v212, 0.0
        %v280 = vsel %vm264, %v213, 0.0
        %v281 = vsel %vm265, %v214, 0.0
        %v282 = vsel %vm266, %v215, 0.0
        %v283 = vsel %vm267, %v216, 0.0
        %v284 = vsel %vm268, %v217, 0.0
        %v285 = vsel %vm269, %v218, 0.0
        %v286 = vsel %vm270, %v219, 0.0
        %v287 = vld [vmem:[%s1] sm:$0xff]
        %v288 = vld [vmem:[%s1 + $0x8] sm:$0xff]
        %vm289 = vcmask 261120
        %v291 = vsel %vm289, %v287, 0
        %v294 = vsel %vm289, %v288, 0
        %v297 = vsel %vm289, %v271, 0
        %v300 = vsel %vm289, %v272, 0
        %v303 = vsel %vm289, %v273, 0
        %v306 = vsel %vm289, %v274, 0
        %v309 = vsel %vm289, %v275, 0
        %v312 = vsel %vm289, %v276, 0
        %v315 = vsel %vm289, %v277, 0
        %v318 = vsel %vm289, %v278, 0
        %v321 = vsel %vm289, %v279, 0
        %v324 = vsel %vm289, %v280, 0
        %v327 = vsel %vm289, %v281, 0
        %v330 = vsel %vm289, %v282, 0
        %v333 = vsel %vm289, %v283, 0
        %v336 = vsel %vm289, %v284, 0
        %v339 = vsel %vm289, %v285, 0
        %v342 = vsel %vm289, %v286, 0
        %344 = vmatprep.subr.mxu0 0.0
        %345 = vmatpush1.xpose.msra.mxu0 %v297
        %346 = vmatprep.subr.mxu0 0.0
        %347 = vmatpush1.xpose.msra.mxu0 %v300
        %348 = vmatprep.subr.mxu0 0.0
        %349 = vmatpush1.xpose.msra.mxu0 %v303
        %350 = vmatprep.subr.mxu0 0.0
        %351 = vmatpush1.xpose.msra.mxu0 %v306
        %352 = vmatprep.subr.mxu0 0.0
        %353 = vmatpush1.xpose.msra.mxu0 %v309
        %354 = vmatprep.subr.mxu0 0.0
        %355 = vmatpush1.xpose.msra.mxu0 %v312
        %356 = vmatprep.subr.mxu0 0.0
        %357 = vmatpush1.xpose.msra.mxu0 %v315
        %358 = vmatprep.subr.mxu0 0.0
        %359 = vmatpush1.xpose.msra.mxu0 %v318
        %360 = vmatprep.subr.mxu0 0.0
        %361 = vmatpush1.xpose.msra.mxu0 %v321
        %362 = vmatprep.subr.mxu0 0.0
        %363 = vmatpush1.xpose.msra.mxu0 %v324
        %364 = vmatprep.subr.mxu0 0.0
        %365 = vmatpush1.xpose.msra.mxu0 %v327
        %366 = vmatprep.subr.mxu0 0.0
        %367 = vmatpush1.xpose.msra.mxu0 %v330
        %368 = vmatprep.subr.mxu0 0.0
        %369 = vmatpush1.xpose.msra.mxu0 %v333
        %370 = vmatprep.subr.mxu0 0.0
        %371 = vmatpush1.xpose.msra.mxu0 %v336
        %372 = vmatprep.subr.mxu0 0.0
        %373 = vmatpush1.xpose.msra.mxu0 %v339
        %374 = vmatprep.subr.mxu0 0.0
        %375 = vmatpush1.xpose.msra.mxu0 %v342
        %376 = vmatprep.subr.mxu0 0.0
        %377 = vmatpush1.xpose.msra.mxu0 0.0
        %378 = vmatprep.subr.mxu0 0.0
        %379 = vmatpush1.xpose.msra.mxu0 0.0
        %380 = vmatprep.subr.mxu0 0.0
        %381 = vmatpush1.xpose.msra.mxu0 0.0
        %382 = vmatprep.subr.mxu0 0.0
        %383 = vmatpush1.xpose.msra.mxu0 0.0
        %384 = vmatprep.subr.mxu0 0.0
        %385 = vmatpush1.xpose.msra.mxu0 0.0
        %386 = vmatprep.subr.mxu0 0.0
        %387 = vmatpush1.xpose.msra.mxu0 0.0
        %388 = vmatprep.subr.mxu0 0.0
        %389 = vmatpush1.xpose.msra.mxu0 0.0
        %390 = vmatprep.subr.mxu0 0.0
        %391 = vmatpush1.xpose.msra.mxu0 0.0
        %392 = vmatprep.subr.mxu0 0.0
        %393 = vmatpush1.xpose.msra.mxu0 0.0
        %394 = vmatprep.subr.mxu0 0.0
        %395 = vmatpush1.xpose.msra.mxu0 0.0
        %396 = vmatprep.subr.mxu0 0.0
        %397 = vmatpush1.xpose.msra.mxu0 0.0
        %398 = vmatprep.subr.mxu0 0.0
        %399 = vmatpush1.xpose.msra.mxu0 0.0
        %400 = vmatprep.subr.mxu0 0.0
        %401 = vmatpush1.xpose.msra.mxu0 0.0
        %402 = vmatprep.subr.mxu0 0.0
        %403 = vmatpush1.xpose.msra.mxu0 0.0
        %404 = vmatprep.subr.mxu0 0.0
        %405 = vmatpush1.xpose.msra.mxu0 0.0
        %406 = vmatprep.subr.mxu0 0.0
        %407 = vmatpush1.xpose.msra.mxu0 0.0
        %408 = vmatprep.mubr.f32.mxu0 0.0
        %409 = vmatmul.mubr.f32.gmra.mrb[0].mxu0 %v291
        %v410 = vpop.f32.mrb[0].mxu0
        %v411 = vadd.f32 0.0, %v410
        %v412 = vpop.f32.mrb[0].mxu0
        %413 = vmatprep.mubr.f32.mxu0 0.0
        %414 = vmatmul.mubr.f32.gmra.mrb[0].mxu0 %v294
        %v415 = vpop.f32.mrb[0].mxu0
        %v416 = vadd.f32 0.0, %v415
        %v417 = vpop.f32.mrb[0].mxu0
        %418 = vdwg.mxu0
        %419 = vst [vmem:[%s177] sm:$0xff] %v411
        %420 = vst [vmem:[%s177 + $0x8] sm:$0xff] %v416
        %421 = vadd.xlane.f32.xlu0 %v411
        %v422 = vpop.xlane.xlu0 %421
        %423 = vadd.xlane.f32.xlu0 %v416
        %v424 = vpop.xlane.xlu0 %423
        %vm425 = vcmask 7168
        %426 = vst.msk [vmem:[%s203] sm:$0xff] %vm425, %v422
        %427 = vst.msk [vmem:[%s203 + $0x8] sm:$0xff] %vm425, %v424
        %s428 = sand.u32 %s73, 1
        %s429 = scalar_lea.sflag [#allocation3], %s428
        %s430 = sand.u32 %s73, 1
        %s431 = smul.addr %s430, 16
        %s432 = scalar_lea.vmem [#allocation2], %s431
        %p433 = scmp.lt.s32.totalorder %s18, 1
        %s434 = scalar_select %p433, %s18, 1
        %s435 = smul.addr %s434, 2
        %s436 = smul.addr %s435, 8
        %s437 = scalar_lea.vmem %s3, %s436
        // Predicated region
        $region29: #{tpu_custom_call.1} parent=27 // pred_check
          %p438 = pneg %p83
        $region30: #{tpu_custom_call.1} parent=27 // pred_check_branch
          %440 = sbr.rel (%p438) target = $region32
        $region31: #{tpu_custom_call.1} parent=27 // pred_region
          %s442 = ssub.s32 256, 256
          %443 = vsyncadd %s429, %s442
          %s444 = smul.addr %s18, 128
          %s445 = scalar_lea.hbm %s2, %s444
          %s446 = sshll.u32 %s432, 4
          %s447 = int_to_ptr.vmem [resolvable:$true] %s446
          %452 = dma.vmem_to_hbm [thread:$0]  %s447, 256, %s445, %s429, 128, 256, 8
        $region32: #{tpu_custom_call.1} parent=27 // pred_fallthru
          _
        // Predicated region
        $region33: #{tpu_custom_call.1} parent=27 // pred_check
          %p453 = pneg %p109
        $region34: #{tpu_custom_call.1} parent=27 // pred_check_branch
          %455 = sbr.rel (%p453) target = $region36
        $region35: #{tpu_custom_call.1} parent=27 // pred_region
          _
        $region36: #{tpu_custom_call.1} parent=27 // pred_fallthru
          _
      $region28: #{tpu_custom_call.1} parent=5 // pred_fallthru
        _
      %p456 = scmp.le.s32.totalorder 2, %s13
      // Predicated region
      $region37: #{tpu_custom_call.1} parent=5 // pred_check
        %p457 = pneg %p456
      $region38: #{tpu_custom_call.1} parent=5 // pred_check_branch
        %459 = sbr.rel (%p457) target = $region40
      $region39: #{tpu_custom_call.1} parent=5 // pred_region
        %s460 = ssub.s32 %s13, 2
        // Predicated region
        $region41: #{tpu_custom_call.1} parent=39 // pred_check
          %p461 = pneg %p89
        $region42: #{tpu_custom_call.1} parent=39 // pred_check_branch
          %463 = sbr.rel (%p461) target = $region44
        $region43: #{tpu_custom_call.1} parent=39 // pred_region
          %s464 = sand.u32 %s74, 1
          %s465 = scalar_lea.sflag [#allocation3], %s464
          %s466 = sand.u32 %s74, 1
          %s467 = smul.addr %s466, 16
          %s468 = scalar_lea.vmem [#allocation2], %s467
          %469 = dma.done %s465, 256
        $region44: #{tpu_custom_call.1} parent=39 // pred_fallthru
          _
        // Predicated region
        $region45: #{tpu_custom_call.1} parent=39 // pred_check
          %p470 = pneg %p115
        $region46: #{tpu_custom_call.1} parent=39 // pred_check_branch
          %472 = sbr.rel (%p470) target = $region48
        $region47: #{tpu_custom_call.1} parent=39 // pred_region
          %p473 = scmp.lt.s32.totalorder %s19, 1
          %s474 = scalar_select %p473, %s19, 1
          %s475 = smul.addr %s474, 2
          %s476 = smul.addr %s475, 8
          %s477 = scalar_lea.vmem %s3, %s476
        $region48: #{tpu_custom_call.1} parent=39 // pred_fallthru
          _
      $region40: #{tpu_custom_call.1} parent=5 // pred_fallthru
        _
    $region6: #{tpu_custom_call.1} parent=1 // loop_footer
      %s17 = sadd.s32 1, %s13
    $region7: #{tpu_custom_call.1} parent=1 // loop_footer_branch
      %12 = sbr.rel target = $region3
    $region8: #{tpu_custom_call.1} parent=1 // loop_exit
      _
    %478 = vsyncpa [#allocation3], 1
    %s479 = scalar_lea.sflag [#allocation3], 1
    %480 = vsyncpa %s479, 1

</llo_original>
